<compile_context>
chip_gen: v7x
topology: tpu7x:2x2x1
jax: 0.10.0
libtpu: 0.0.40
codegen_flags: <defaults>
</compile_context>

<pallas_src>
import functools

import jax
import jax.numpy as jnp
from jax.experimental import pallas as pl
from jax.experimental.pallas import tpu as pltpu


def _round_up(x, m):
    return ((x + m - 1) // m) * m


def _critic_kernel(dims, st_ref, at_ref, w_ref, out_ref):
    """Fused MLP in transposed layout: [feat, tile_b] activations, [1, tile_b] out."""
    S, A, H1, H2, r2, r3 = dims

    s_t = st_ref[...]                                   # [S,  Bt]
    a_t = at_ref[...]                                   # [A,  Bt]

    # Static views into the packed weight slab (zero-cost slicing, tiny data).
    w1s = w_ref[0:H1, 0:S]                              # [H1, S]
    w1a = w_ref[0:H1, S:S + A]                          # [H1, A]
    b1 = w_ref[0:H1, S + A:S + A + 1]                   # [H1, 1]
    w2 = w_ref[r2:r2 + H2, 0:H1]                        # [H2, H1]  (LN1 affine folded)
    b2 = w_ref[r2:r2 + H2, H1:H1 + 1]                   # [H2, 1]
    w3 = w_ref[r3:r3 + H2, 0:1]                         # [H2, 1]   (LN2 affine folded)
    b3 = w_ref[r3:r3 + 1, 1:2]                          # [1, 1]

    def layernorm(h, eps=1e-5):
        # Reduce over the feature (sublane) axis; two independent reductions so
        # the XLU reduces can issue back-to-back.  f32 throughout, var clamped.
        n = h.shape[0]
        s1 = jnp.sum(h, axis=0, keepdims=True)           # [1, Bt]
        s2 = jnp.sum(h * h, axis=0, keepdims=True)       # [1, Bt]
        mu = s1 * (1.0 / n)
        var = jnp.maximum(s2 * (1.0 / n) - mu * mu, 0.0)
        return (h - mu) * jax.lax.rsqrt(var + eps)

    # Layer 1: split-W1 matmul (no concat), ReLU, LayerNorm.
    h = (jnp.dot(w1s, s_t, preferred_element_type=jnp.float32)
         + jnp.dot(w1a, a_t, preferred_element_type=jnp.float32)
         + b1)                                           # [H1, Bt]
    h = layernorm(jnp.maximum(h, 0.0))

    # Layer 2 (LN1 affine pre-folded into w2/b2): matmul, ReLU, LayerNorm.
    h = jnp.dot(w2, h, preferred_element_type=jnp.float32) + b2   # [H2, Bt]
    h = layernorm(jnp.maximum(h, 0.0))

    # Layer 3 (H2 -> 1, LN2 affine pre-folded): VPU multiply + sublane reduce.
    q = jnp.sum(h * w3, axis=0, keepdims=True) + b3      # [1, Bt]

    # Dropout(0.2) is identity in eval mode.
    out_ref[...] = q


def pack_critic_params(params):
    """Fold LN affines into the following Linears and pack everything into one
    [rows, 128] f32 slab (done once, off the latency path)."""
    w1s = params["w1_s"].astype(jnp.float32)             # [S,  H1]
    w1a = params["w1_a"].astype(jnp.float32)             # [A,  H1]
    b1 = params["b1"].reshape(-1).astype(jnp.float32)    # [H1]
    g1 = params["g1"].reshape(-1).astype(jnp.float32)
    be1 = params["be1"].reshape(-1).astype(jnp.float32)
    w2 = params["w2"].astype(jnp.float32)                # [H1, H2]
    b2 = params["b2"].reshape(-1).astype(jnp.float32)    # [H2]
    g2 = params["g2"].reshape(-1).astype(jnp.float32)
    be2 = params["be2"].reshape(-1).astype(jnp.float32)
    w3 = params["w3"].reshape(-1).astype(jnp.float32)    # [H2]
    b3 = jnp.asarray(params["b3"], jnp.float32).reshape(())

    S, H1 = w1s.shape
    A = w1a.shape[0]
    H2 = w2.shape[1]

    # Fold LayerNorm affines: y*g + be followed by Linear(W, b) is equivalent to
    # y @ (diag(g) W) + (be @ W + b).
    w2f = g1[:, None] * w2                                # [H1, H2]
    b2f = be1 @ w2 + b2                                   # [H2]
    w3f = g2 * w3                                         # [H2]
    b3f = jnp.sum(be2 * w3) + b3                          # scalar

    n_cols = 128
    assert S + A + 1 <= n_cols and H1 + 1 <= n_cols and H2 <= n_cols, \
        "feature dims too wide for the packed 128-lane slab"
    r2 = _round_up(H1, 8)
    r3 = _round_up(r2 + H2, 8)
    n_rows = _round_up(r3 + H2, 8)

    slab = jnp.zeros((n_rows, n_cols), jnp.float32)
    slab = slab.at[0:H1, 0:S].set(w1s.T)                  # W1 (state part), transposed
    slab = slab.at[0:H1, S:S + A].set(w1a.T)              # W1 (action part), transposed
    slab = slab.at[0:H1, S + A].set(b1)                   # b1 column
    slab = slab.at[r2:r2 + H2, 0:H1].set(w2f.T)           # folded W2, transposed
    slab = slab.at[r2:r2 + H2, H1].set(b2f)               # folded b2 column
    slab = slab.at[r3:r3 + H2, 0].set(w3f)                # folded w3 column
    slab = slab.at[r3, 1].set(b3f)                        # folded b3 scalar

    dims = {"S": S, "A": A, "H1": H1, "H2": H2, "r2": r2, "r3": r3}
    return slab, dims


def _choose_tiling(batch, max_tile_b):
    """Batch tiling over the lane axis: tile multiple of 128, >=2 tiles when the
    batch allows so v7x's two TensorCores both get work, minimal padding."""
    b128 = _round_up(batch, 128)
    if b128 <= 128:
        return 128, 128, 1
    rough = min(max_tile_b, max(128, (b128 // 2) // 128 * 128))
    num_tiles = -(-b128 // rough)
    tile_b = _round_up(-(-b128 // num_tiles), 128)
    b_pad = num_tiles * tile_b
    return tile_b, b_pad, num_tiles


def critic_forward(state, action, slab, dims, max_tile_b=1024):
    """Q(state, action) via one batch-tiled pallas_call (packed, folded params)."""
    if state.dtype != jnp.float32:
        state = state.astype(jnp.float32)
    if action.dtype != jnp.float32:
        action = action.astype(jnp.float32)

    batch = state.shape[0]
    S, A = dims["S"], dims["A"]
    tile_b, b_pad, num_tiles = _choose_tiling(batch, max_tile_b)

    # Batch-in-lanes layout: one small fused transpose(+pad) per input.
    st = state.T                                          # [S, batch]
    at = action.T                                         # [A, batch]
    if b_pad != batch:
        st = jnp.pad(st, ((0, 0), (0, b_pad - batch)))
        at = jnp.pad(at, ((0, 0), (0, b_pad - batch)))

    kernel = functools.partial(
        _critic_kernel,
        (S, A, dims["H1"], dims["H2"], dims["r2"], dims["r3"]))

    q = pl.pallas_call(
        kernel,
        out_shape=jax.ShapeDtypeStruct((1, b_pad), jnp.float32),
        grid=(num_tiles,),
        in_specs=[
            pl.BlockSpec((S, tile_b), lambda i: (0, i)),
            pl.BlockSpec((A, tile_b), lambda i: (0, i)),
            # Weight slab: constant index_map -> stays VMEM-resident across steps.
            pl.BlockSpec(slab.shape, lambda i: (0, 0)),
        ],
        out_specs=pl.BlockSpec((1, tile_b), lambda i: (0, i)),
        compiler_params=pltpu.CompilerParams(
            dimension_semantics=("parallel",)),
    )(st, at, slab)

    return q[0, :batch].reshape(batch, 1)


def critic_reference(state, action, params):
    """Pure-JAX reference mirroring the PyTorch module (eval-mode dropout)."""
    x = jnp.concatenate([state, action], axis=1).astype(jnp.float32)

    def ln(h, g, b):
        mu = jnp.mean(h, axis=-1, keepdims=True)
        var = jnp.mean((h - mu) ** 2, axis=-1, keepdims=True)
        return (h - mu) * jax.lax.rsqrt(var + 1e-5) * g + b

    w1 = jnp.concatenate([params["w1_s"], params["w1_a"]], axis=0)
    h = jnp.maximum(x @ w1 + params["b1"], 0.0)
    h = ln(h, params["g1"], params["be1"])
    h = jnp.maximum(h @ params["w2"] + params["b2"], 0.0)
    h = ln(h, params["g2"], params["be2"])
    return h @ params["w3"][:, None] + params["b3"]


def init_critic_params(key, state_size, action_size, n_hiddens1=20, n_hiddens2=20):
    """Fan-in-uniform init matching CriticNet.__init__ shapes.
    Linear weights stored as [in, out]; W1 pre-split into state/action parts."""
    in_dim = state_size + action_size
    k = jax.random.split(key, 6)

    def unif(kk, shape, fan_in):
        bound = 1.0 / jnp.sqrt(jnp.float32(fan_in))
        return jax.random.uniform(kk, shape, jnp.float32, -bound, bound)

    w1 = unif(k[0], (in_dim, n_hiddens1), in_dim)
    return {
        "w1_s": w1[:state_size],
        "w1_a": w1[state_size:],
        "b1": unif(k[1], (n_hiddens1,), in_dim),
        "g1": jnp.ones((n_hiddens1,), jnp.float32),       # LayerNorm defaults
        "be1": jnp.zeros((n_hiddens1,), jnp.float32),
        "w2": unif(k[2], (n_hiddens1, n_hiddens2), n_hiddens1),
        "b2": unif(k[3], (n_hiddens2,), n_hiddens1),
        "g2": jnp.ones((n_hiddens2,), jnp.float32),
        "be2": jnp.zeros((n_hiddens2,), jnp.float32),
        "w3": unif(k[4], (n_hiddens2,), n_hiddens2),
        "b3": unif(k[5], (), n_hiddens2),
    }


if __name__ == "__main__":
    key = jax.random.PRNGKey(0)
    k_state, k_action, k_params, k_aff, k_big = jax.random.split(key, 5)

    batch, state_size, action_size = 8, 16, 8
    state = jax.random.normal(k_state, (batch, state_size), jnp.float32)
    action = jax.random.normal(k_action, (batch, action_size), jnp.float32)
    params = init_critic_params(k_params, state_size, action_size)

    # Use non-trivial ("trained") LN gamma/beta so the affine folding is exercised.
    ka = jax.random.split(k_aff, 4)
    params["g1"] = 1.0 + 0.1 * jax.random.normal(ka[0], (20,), jnp.float32)
    params["be1"] = 0.1 * jax.random.normal(ka[1], (20,), jnp.float32)
    params["g2"] = 1.0 + 0.1 * jax.random.normal(ka[2], (20,), jnp.float32)
    params["be2"] = 0.1 * jax.random.normal(ka[3], (20,), jnp.float32)

    slab, dims = pack_critic_params(params)

    # Small batch (single grid tile).
    q = critic_forward(state, action, slab, dims)
    q_ref = critic_reference(state, action, params)

    # Larger, non-aligned batch (multi-tile grid, padded lane tail).
    kb1, kb2 = jax.random.split(k_big)
    big_b = 300
    state_big = jax.random.normal(kb1, (big_b, state_size), jnp.float32)
    action_big = jax.random.normal(kb2, (big_b, action_size), jnp.float32)
    q_big = critic_forward(state_big, action_big, slab, dims)
    q_big_ref = critic_reference(state_big, action_big, params)

    jax.block_until_ready((q, q_ref, q_big, q_big_ref))

    assert q.shape == (batch, 1), q.shape
    assert q.dtype == jnp.float32, q.dtype
    assert jnp.allclose(q, q_ref, atol=1e-4, rtol=1e-4), "small-batch mismatch"
    assert q_big.shape == (big_b, 1), q_big.shape
    assert jnp.allclose(q_big, q_big_ref, atol=1e-4, rtol=1e-4), "big-batch mismatch"

    print("KERNEL_OK")
</pallas_src>

<mosaic_0001>
module attributes {stable_mosaic.version = 11 : i64} {
  func.func @_critic_kernel(%arg0: i32, %arg1: memref<16x128xf32, #tpu.memory_space<vmem>>, %arg2: memref<8x128xf32, #tpu.memory_space<vmem>>, %arg3: memref<72x128xf32, #tpu.memory_space<vmem>>, %arg4: memref<1x128xf32, #tpu.memory_space<vmem>>) attributes {dimension_semantics = [#tpu.dimension_semantics<parallel>], iteration_bounds = array<i64: 1>, scalar_prefetch = 0 : i64, scratch_operands = 0 : i64, tpu.core_type = #tpu.core_type<tc>, window_params = [{transform_indices = @transform_0, window_bounds = array<i64: 16, 128>}, {transform_indices = @transform_1, window_bounds = array<i64: 8, 128>}, {pipeline_mode = #tpu.pipeline_mode<synchronous>, transform_indices = @transform_2, window_bounds = array<i64: 72, 128>}, {transform_indices = @transform_3, window_bounds = array<i64: 1, 128>}]} {
    %c0 = arith.constant 0 : index
    %c0_0 = arith.constant 0 : index
    %0 = vector.load %arg1[%c0, %c0_0] : memref<16x128xf32, #tpu.memory_space<vmem>>, vector<16x128xf32>
    %c0_1 = arith.constant 0 : index
    %c0_2 = arith.constant 0 : index
    %1 = vector.load %arg2[%c0_1, %c0_2] : memref<8x128xf32, #tpu.memory_space<vmem>>, vector<8x128xf32>
    %c0_3 = arith.constant 0 : index
    %c0_4 = arith.constant 0 : index
    %2 = vector.load %arg3[%c0_3, %c0_4] : memref<72x128xf32, #tpu.memory_space<vmem>>, vector<20x16xf32>
    %c0_5 = arith.constant 0 : index
    %c16 = arith.constant 16 : index
    %3 = vector.load %arg3[%c0_5, %c16] : memref<72x128xf32, #tpu.memory_space<vmem>>, vector<20x8xf32>
    %c0_6 = arith.constant 0 : index
    %c24 = arith.constant 24 : index
    %4 = vector.load %arg3[%c0_6, %c24] : memref<72x128xf32, #tpu.memory_space<vmem>>, vector<20x1xf32>
    %c24_7 = arith.constant 24 : index
    %c0_8 = arith.constant 0 : index
    %5 = vector.load %arg3[%c24_7, %c0_8] : memref<72x128xf32, #tpu.memory_space<vmem>>, vector<20x20xf32>
    %c24_9 = arith.constant 24 : index
    %c20 = arith.constant 20 : index
    %6 = vector.load %arg3[%c24_9, %c20] : memref<72x128xf32, #tpu.memory_space<vmem>>, vector<20x1xf32>
    %c48 = arith.constant 48 : index
    %c0_10 = arith.constant 0 : index
    %7 = vector.load %arg3[%c48, %c0_10] : memref<72x128xf32, #tpu.memory_space<vmem>>, vector<20x1xf32>
    %c48_11 = arith.constant 48 : index
    %c1 = arith.constant 1 : index
    %8 = vector.load %arg3[%c48_11, %c1] : memref<72x128xf32, #tpu.memory_space<vmem>>, vector<1x1xf32>
    %cst = arith.constant dense<0.000000e+00> : vector<20x128xf32>
    %9 = tpu.matmul %2, %0, %cst {dimension_numbers = #tpu.dot_dimension_numbers<[1], [0], [0], [1], [0, 0, 1, 1], [], []>} : vector<20x16xf32>, vector<16x128xf32>, vector<20x128xf32> -> vector<20x128xf32>
    %cst_12 = arith.constant dense<0.000000e+00> : vector<20x128xf32>
    %10 = tpu.matmul %3, %1, %cst_12 {dimension_numbers = #tpu.dot_dimension_numbers<[1], [0], [0], [1], [0, 0, 1, 1], [], []>} : vector<20x8xf32>, vector<8x128xf32>, vector<20x128xf32> -> vector<20x128xf32>
    %11 = arith.addf %9, %10 : vector<20x128xf32>
    %12 = vector.broadcast %4 : vector<20x1xf32> to vector<20x128xf32>
    %13 = arith.addf %11, %12 : vector<20x128xf32>
    %cst_13 = arith.constant 0.000000e+00 : f32
    %14 = vector.broadcast %cst_13 : f32 to vector<20x128xf32>
    %15 = arith.maximumf %13, %14 : vector<20x128xf32>
    %cst_14 = arith.constant dense<0.000000e+00> : vector<128xf32>
    %16 = vector.multi_reduction <add>, %15, %cst_14 [0] : vector<20x128xf32> to vector<128xf32>
    %17 = vector.shape_cast %16 : vector<128xf32> to vector<1x128xf32>
    %18 = arith.mulf %15, %15 : vector<20x128xf32>
    %cst_15 = arith.constant dense<0.000000e+00> : vector<128xf32>
    %19 = vector.multi_reduction <add>, %18, %cst_15 [0] : vector<20x128xf32> to vector<128xf32>
    %20 = vector.shape_cast %19 : vector<128xf32> to vector<1x128xf32>
    %cst_16 = arith.constant 5.000000e-02 : f32
    %21 = vector.broadcast %cst_16 : f32 to vector<1x128xf32>
    %22 = arith.mulf %17, %21 : vector<1x128xf32>
    %cst_17 = arith.constant 5.000000e-02 : f32
    %23 = vector.broadcast %cst_17 : f32 to vector<1x128xf32>
    %24 = arith.mulf %20, %23 : vector<1x128xf32>
    %25 = arith.mulf %22, %22 : vector<1x128xf32>
    %26 = arith.subf %24, %25 : vector<1x128xf32>
    %cst_18 = arith.constant 0.000000e+00 : f32
    %27 = vector.broadcast %cst_18 : f32 to vector<1x128xf32>
    %28 = arith.maximumf %26, %27 : vector<1x128xf32>
    %29 = vector.broadcast %22 : vector<1x128xf32> to vector<20x128xf32>
    %30 = arith.subf %15, %29 : vector<20x128xf32>
    %cst_19 = arith.constant 9.99999974E-6 : f32
    %31 = vector.broadcast %cst_19 : f32 to vector<1x128xf32>
    %32 = arith.addf %28, %31 : vector<1x128xf32>
    %33 = math.rsqrt %32 : vector<1x128xf32>
    %34 = vector.broadcast %33 : vector<1x128xf32> to vector<20x128xf32>
    %35 = arith.mulf %30, %34 : vector<20x128xf32>
    %cst_20 = arith.constant dense<0.000000e+00> : vector<20x128xf32>
    %36 = tpu.matmul %5, %35, %cst_20 {dimension_numbers = #tpu.dot_dimension_numbers<[1], [0], [0], [1], [0, 0, 1, 1], [], []>} : vector<20x20xf32>, vector<20x128xf32>, vector<20x128xf32> -> vector<20x128xf32>
    %37 = vector.broadcast %6 : vector<20x1xf32> to vector<20x128xf32>
    %38 = arith.addf %36, %37 : vector<20x128xf32>
    %cst_21 = arith.constant 0.000000e+00 : f32
    %39 = vector.broadcast %cst_21 : f32 to vector<20x128xf32>
    %40 = arith.maximumf %38, %39 : vector<20x128xf32>
    %cst_22 = arith.constant dense<0.000000e+00> : vector<128xf32>
    %41 = vector.multi_reduction <add>, %40, %cst_22 [0] : vector<20x128xf32> to vector<128xf32>
    %42 = vector.shape_cast %41 : vector<128xf32> to vector<1x128xf32>
    %43 = arith.mulf %40, %40 : vector<20x128xf32>
    %cst_23 = arith.constant dense<0.000000e+00> : vector<128xf32>
    %44 = vector.multi_reduction <add>, %43, %cst_23 [0] : vector<20x128xf32> to vector<128xf32>
    %45 = vector.shape_cast %44 : vector<128xf32> to vector<1x128xf32>
    %cst_24 = arith.constant 5.000000e-02 : f32
    %46 = vector.broadcast %cst_24 : f32 to vector<1x128xf32>
    %47 = arith.mulf %42, %46 : vector<1x128xf32>
    %cst_25 = arith.constant 5.000000e-02 : f32
    %48 = vector.broadcast %cst_25 : f32 to vector<1x128xf32>
    %49 = arith.mulf %45, %48 : vector<1x128xf32>
    %50 = arith.mulf %47, %47 : vector<1x128xf32>
    %51 = arith.subf %49, %50 : vector<1x128xf32>
    %cst_26 = arith.constant 0.000000e+00 : f32
    %52 = vector.broadcast %cst_26 : f32 to vector<1x128xf32>
    %53 = arith.maximumf %51, %52 : vector<1x128xf32>
    %54 = vector.broadcast %47 : vector<1x128xf32> to vector<20x128xf32>
    %55 = arith.subf %40, %54 : vector<20x128xf32>
    %cst_27 = arith.constant 9.99999974E-6 : f32
    %56 = vector.broadcast %cst_27 : f32 to vector<1x128xf32>
    %57 = arith.addf %53, %56 : vector<1x128xf32>
    %58 = math.rsqrt %57 : vector<1x128xf32>
    %59 = vector.broadcast %58 : vector<1x128xf32> to vector<20x128xf32>
    %60 = arith.mulf %55, %59 : vector<20x128xf32>
    %61 = vector.broadcast %7 : vector<20x1xf32> to vector<20x128xf32>
    %62 = arith.mulf %60, %61 : vector<20x128xf32>
    %cst_28 = arith.constant dense<0.000000e+00> : vector<128xf32>
    %63 = vector.multi_reduction <add>, %62, %cst_28 [0] : vector<20x128xf32> to vector<128xf32>
    %64 = vector.shape_cast %63 : vector<128xf32> to vector<1x128xf32>
    %65 = vector.broadcast %8 : vector<1x1xf32> to vector<1x128xf32>
    %66 = arith.addf %64, %65 : vector<1x128xf32>
    %c0_29 = arith.constant 0 : index
    %c0_30 = arith.constant 0 : index
    %67 = vector.load %arg4[%c0_29, %c0_30] : memref<1x128xf32, #tpu.memory_space<vmem>>, vector<1x128xf32>
    tpu.vector_store %arg4[%c0_29, %c0_30], %66 {strides = array<i32>} : memref<1x128xf32, #tpu.memory_space<vmem>>, vector<1x128xf32>,
    return
  }
  func.func @transform_0(%arg0: i32) -> (i32, i32) {
    %c0_i32 = arith.constant 0 : i32
    %c0_i32_0 = arith.constant 0 : i32
    return %c0_i32, %arg0 : i32, i32
  }
  func.func @transform_1(%arg0: i32) -> (i32, i32) {
    %c0_i32 = arith.constant 0 : i32
    %c0_i32_0 = arith.constant 0 : i32
    return %c0_i32, %arg0 : i32, i32
  }
  func.func @transform_2(%arg0: i32) -> (i32, i32) {
    %c0_i32 = arith.constant 0 : i32
    %c0_i32_0 = arith.constant 0 : i32
    %c0_i32_1 = arith.constant 0 : i32
    return %c0_i32, %c0_i32_0 : i32, i32
  }
  func.func @transform_3(%arg0: i32) -> (i32, i32) {
    %c0_i32 = arith.constant 0 : i32
    %c0_i32_0 = arith.constant 0 : i32
    return %c0_i32, %arg0 : i32, i32
  }
}

</mosaic_0001>

<llo_original>
// kernel: tpu_custom_call.1
$region0: #{tpu_custom_call.1}
  #allocation0 [shape = 'u32[]', space=smem, size = 0x4, offset = 0x4, fixed_abs, tag = 'smem constant byte address 0x4 - core index']
  #allocation1 [shape = 'u32[144,128]{1,0:T(1,128)}', space=vmem, size = 0x12000, scoped, tag = 'internal scratch']
  %s0 = inlined_call_operand.hbm [shape: f32[16,128], index: 0, kind: input, shape index: {}]
  %s1 = inlined_call_operand.hbm [shape: f32[8,128], index: 1, kind: input, shape index: {}]
  %s2 = inlined_call_operand.hbm [shape: f32[72,128], index: 2, kind: input, shape index: {}]
  %s3 = inlined_call_operand.hbm [shape: f32[1,128], index: 3, kind: output, shape index: {}]
  %s4 = sld [smem:[#allocation0]]
  $region34: #{tpu_custom_call.1} parent=0
    _
  %s6 = ssub.s32 1, %s4
  %s7 = scalar_select 0, %s6, %s4
  $region1: #{tpu_custom_call.1} parent=0
    #allocation2 [shape = 'u8[8192]{0}', space=vmem, size = 0x2000, scoped, tag = 'input window, operand 0, single buffered']
    #allocation3 [shape = 's32[1]{0}', space=sflag, size = 0x4, scoped, tag = 'scoped memory for tpu_custom_call.1']
    #allocation4 [shape = 's32[1]{0}', space=sflag, size = 0x4, scoped, tag = 'scoped memory for tpu_custom_call.1']
    #allocation5 [shape = 'u8[4096]{0}', space=vmem, size = 0x1000, scoped, tag = 'input window, operand 1, single buffered']
    #allocation6 [shape = 's32[1]{0}', space=sflag, size = 0x4, scoped, tag = 'scoped memory for tpu_custom_call.1']
    #allocation7 [shape = 'u8[36864]{0}', space=vmem, size = 0x9000, scoped, tag = 'input window, operand 2, single buffered']
    #allocation8 [shape = 'u8[512]{0}', space=vmem, size = 0x400, scoped, tag = 'output window, operand 0, single buffered']
    %8 = vsyncpa [#allocation3], 0
    %9 = vsyncpa [#allocation6], 0
    %10 = vsyncpa [#allocation4], 0
    // Predicated region
    $region2: #{tpu_custom_call.1} parent=1 // pred_check
      _
    $region3: #{tpu_custom_call.1} parent=1 // pred_check_branch
      %12 = sbr.rel (0) target = $region5
    $region4: #{tpu_custom_call.1} parent=1 // pred_region
      %s14 = ssub.s32 256, 256
      %15 = vsyncadd [#allocation3], %s14
      %s16 = sshll.u32 [#allocation2], 4
      %s17 = int_to_ptr.vmem [resolvable:$true] %s16
      %22 = dma.hbm_to_vmem [thread:$0]  %s0, 256, %s17, [#allocation3], 128, 128, 8
    $region5: #{tpu_custom_call.1} parent=1 // pred_fallthru
      _
    // Predicated region
    $region6: #{tpu_custom_call.1} parent=1 // pred_check
      _
    $region7: #{tpu_custom_call.1} parent=1 // pred_check_branch
      %24 = sbr.rel (0) target = $region9
    $region8: #{tpu_custom_call.1} parent=1 // pred_region
      %s26 = ssub.s32 128, 128
      %27 = vsyncadd [#allocation6], %s26
      %s29 = sshll.u32 [#allocation5], 4
      %s30 = int_to_ptr.vmem [resolvable:$true] %s29
      %32 = dma.hbm_to_vmem [thread:$0]  %s1, 128, %s30, [#allocation6]
    $region9: #{tpu_custom_call.1} parent=1 // pred_fallthru
      _
    // Predicated region
    $region10: #{tpu_custom_call.1} parent=1 // pred_check
      _
    $region11: #{tpu_custom_call.1} parent=1 // pred_check_branch
      %34 = sbr.rel (0) target = $region13
    $region12: #{tpu_custom_call.1} parent=1 // pred_region
      %s36 = ssub.s32 1152, 1152
      %37 = vsyncadd [#allocation6], %s36
      %s38 = sshll.u32 [#allocation7], 4
      %s39 = int_to_ptr.vmem [resolvable:$true] %s38
      %44 = dma.hbm_to_vmem [thread:$0]  %s2, 1152, %s39, [#allocation6], 128, 128, 8
    $region13: #{tpu_custom_call.1} parent=1 // pred_fallthru
      _
    // Predicated region
    $region14: #{tpu_custom_call.1} parent=1 // pred_check
      _
    $region15: #{tpu_custom_call.1} parent=1 // pred_check_branch
      %46 = sbr.rel (0) target = $region17
    $region16: #{tpu_custom_call.1} parent=1 // pred_region
      %47 = dma.done [#allocation3], 256
    $region17: #{tpu_custom_call.1} parent=1 // pred_fallthru
      _
    // Predicated region
    $region18: #{tpu_custom_call.1} parent=1 // pred_check
      _
    $region19: #{tpu_custom_call.1} parent=1 // pred_check_branch
      %49 = sbr.rel (0) target = $region21
    $region20: #{tpu_custom_call.1} parent=1 // pred_region
      %50 = dma.done [#allocation6], 128
    $region21: #{tpu_custom_call.1} parent=1 // pred_fallthru
      _
    // Predicated region
    $region22: #{tpu_custom_call.1} parent=1 // pred_check
      _
    $region23: #{tpu_custom_call.1} parent=1 // pred_check_branch
      %52 = sbr.rel (0) target = $region25
    $region24: #{tpu_custom_call.1} parent=1 // pred_region
      %53 = dma.done [#allocation6], 1152
    $region25: #{tpu_custom_call.1} parent=1 // pred_fallthru
      _
    %v54 = vld [vmem:[#allocation2] sm:$0xff]
    %v55 = vld [vmem:[#allocation2 + $0x8] sm:$0xff]
    %v56 = vld [vmem:[#allocation5] sm:$0xff]
    %v57 = vld [vmem:[#allocation7] sm:$0xff]
    %v58 = vld [vmem:[#allocation7 + $0x8] sm:$0xff]
    %v59 = vld [vmem:[#allocation7 + $0x10] sm:$0xf]
    %v60 = vld [vmem:[#allocation7 + $0x18] sm:$0xff]
    %v61 = vld [vmem:[#allocation7 + $0x20] sm:$0xff]
    %v62 = vld [vmem:[#allocation7 + $0x28] sm:$0xf]
    %v63 = vld [vmem:[#allocation7 + $0x30] sm:$0xff]
    %v64 = vld [vmem:[#allocation7 + $0x38] sm:$0xff]
    %v65 = vld [vmem:[#allocation7 + $0x40] sm:$0xf]
    %v66 = vld [vmem:[#allocation7 + $0x30] sm:$0x1]
    %70 = vrot.lane.b32.xlu0 %v57, 112
    %v71 = vpop.permute.xlu0 %70
    %72 = vrot.lane.b32.xlu0 %v58, 112
    %v73 = vpop.permute.xlu0 %72
    %74 = vrot.lane.b32.xlu0 %v59, 112
    %v75 = vpop.permute.xlu0 %74
    %vm76 = vcmask 64512
    %v77 = vsel %vm76, %v71, 0
    %v79 = vsel %vm76, %v73, 0
    %v81 = vsel %vm76, %v75, 0
    %83 = vmatprep.subr.mxu0 0.0
    %84 = vmatpush1.msra.mxu0 %v56
    %85 = vmatprep.subr.mxu0 0.0
    %86 = vmatpush1.msra.mxu0 0.0
    %87 = vmatprep.subr.mxu0 0.0
    %88 = vmatpush1.msra.mxu0 0.0
    %89 = vmatprep.subr.mxu0 0.0
    %90 = vmatpush1.msra.mxu0 0.0
    %91 = vmatprep.subr.mxu0 0.0
    %92 = vmatpush1.msra.mxu0 0.0
    %93 = vmatprep.subr.mxu0 0.0
    %94 = vmatpush1.msra.mxu0 0.0
    %95 = vmatprep.subr.mxu0 0.0
    %96 = vmatpush1.msra.mxu0 0.0
    %97 = vmatprep.subr.mxu0 0.0
    %98 = vmatpush1.msra.mxu0 0.0
    %99 = vmatprep.subr.mxu0 0.0
    %100 = vmatpush1.msra.mxu0 0.0
    %101 = vmatprep.subr.mxu0 0.0
    %102 = vmatpush1.msra.mxu0 0.0
    %103 = vmatprep.subr.mxu0 0.0
    %104 = vmatpush1.msra.mxu0 0.0
    %105 = vmatprep.subr.mxu0 0.0
    %106 = vmatpush1.msra.mxu0 0.0
    %107 = vmatprep.subr.mxu0 0.0
    %108 = vmatpush1.msra.mxu0 0.0
    %109 = vmatprep.subr.mxu0 0.0
    %110 = vmatpush1.msra.mxu0 0.0
    %111 = vmatprep.subr.mxu0 0.0
    %112 = vmatpush1.msra.mxu0 0.0
    %113 = vmatprep.subr.mxu0 0.0
    %114 = vmatpush1.msra.mxu0 0.0
    %115 = vmatprep.subr.mxu0 0.0
    %116 = vmatpush1.msra.mxu0 0.0
    %117 = vmatprep.subr.mxu0 0.0
    %118 = vmatpush1.msra.mxu0 0.0
    %119 = vmatprep.subr.mxu0 0.0
    %120 = vmatpush1.msra.mxu0 0.0
    %121 = vmatprep.subr.mxu0 0.0
    %122 = vmatpush1.msra.mxu0 0.0
    %123 = vmatprep.subr.mxu0 0.0
    %124 = vmatpush1.msra.mxu0 0.0
    %125 = vmatprep.subr.mxu0 0.0
    %126 = vmatpush1.msra.mxu0 0.0
    %127 = vmatprep.subr.mxu0 0.0
    %128 = vmatpush1.msra.mxu0 0.0
    %129 = vmatprep.subr.mxu0 0.0
    %130 = vmatpush1.msra.mxu0 0.0
    %131 = vmatprep.subr.mxu0 0.0
    %132 = vmatpush1.msra.mxu0 0.0
    %133 = vmatprep.subr.mxu0 0.0
    %134 = vmatpush1.msra.mxu0 0.0
    %135 = vmatprep.subr.mxu0 0.0
    %136 = vmatpush1.msra.mxu0 0.0
    %137 = vmatprep.subr.mxu0 0.0
    %138 = vmatpush1.msra.mxu0 0.0
    %139 = vmatprep.subr.mxu0 0.0
    %140 = vmatpush1.msra.mxu0 0.0
    %141 = vmatprep.subr.mxu0 0.0
    %142 = vmatpush1.msra.mxu0 0.0
    %143 = vmatprep.subr.mxu0 0.0
    %144 = vmatpush1.msra.mxu0 0.0
    %145 = vmatprep.subr.mxu0 0.0
    %146 = vmatpush1.msra.mxu0 0.0
    %147 = vmatprep.mubr.f32.mxu0 0.0
    %148 = vmatmul.mubr.f32.gmra.mrb[0].mxu0 %v77
    %v149 = vpop.f32.mrb[0].mxu0
    %v150 = vadd.f32 0.0, %v149
    %v151 = vpop.f32.mrb[0].mxu0
    %152 = vmatprep.mubr.f32.mxu0 0.0
    %153 = vmatmul.mubr.f32.gmra.mrb[0].mxu0 %v79
    %v154 = vpop.f32.mrb[0].mxu0
    %v155 = vadd.f32 0.0, %v154
    %v156 = vpop.f32.mrb[0].mxu0
    %157 = vmatprep.mubr.f32.mxu0 0.0
    %158 = vmatmul.mubr.f32.gmra.mrb[0].mxu0 %v81
    %v159 = vpop.f32.mrb[0].mxu0
    %v160 = vadd.f32 0.0, %v159
    %v161 = vpop.f32.mrb[0].mxu0
    %162 = vdwg.mxu0
    %vm163 = vcmask 130048
    %v164 = vsel %vm163, %v57, 0
    %v166 = vsel %vm163, %v58, 0
    %v168 = vsel %vm163, %v59, 0
    %170 = vmatprep.subr.mxu0 0.0
    %171 = vmatpush1.msra.mxu0 %v54
    %172 = vmatprep.subr.mxu0 0.0
    %173 = vmatpush1.msra.mxu0 %v55
    %174 = vmatprep.subr.mxu0 0.0
    %175 = vmatpush1.msra.mxu0 0.0
    %176 = vmatprep.subr.mxu0 0.0
    %177 = vmatpush1.msra.mxu0 0.0
    %178 = vmatprep.subr.mxu0 0.0
    %179 = vmatpush1.msra.mxu0 0.0
    %180 = vmatprep.subr.mxu0 0.0
    %181 = vmatpush1.msra.mxu0 0.0
    %182 = vmatprep.subr.mxu0 0.0
    %183 = vmatpush1.msra.mxu0 0.0
    %184 = vmatprep.subr.mxu0 0.0
    %185 = vmatpush1.msra.mxu0 0.0
    %186 = vmatprep.subr.mxu0 0.0
    %187 = vmatpush1.msra.mxu0 0.0
    %188 = vmatprep.subr.mxu0 0.0
    %189 = vmatpush1.msra.mxu0 0.0
    %190 = vmatprep.subr.mxu0 0.0
    %191 = vmatpush1.msra.mxu0 0.0
    %192 = vmatprep.subr.mxu0 0.0
    %193 = vmatpush1.msra.mxu0 0.0
    %194 = vmatprep.subr.mxu0 0.0
    %195 = vmatpush1.msra.mxu0 0.0
    %196 = vmatprep.subr.mxu0 0.0
    %197 = vmatpush1.msra.mxu0 0.0
    %198 = vmatprep.subr.mxu0 0.0
    %199 = vmatpush1.msra.mxu0 0.0
    %200 = vmatprep.subr.mxu0 0.0
    %201 = vmatpush1.msra.mxu0 0.0
    %202 = vmatprep.subr.mxu0 0.0
    %203 = vmatpush1.msra.mxu0 0.0
    %204 = vmatprep.subr.mxu0 0.0
    %205 = vmatpush1.msra.mxu0 0.0
    %206 = vmatprep.subr.mxu0 0.0
    %207 = vmatpush1.msra.mxu0 0.0
    %208 = vmatprep.subr.mxu0 0.0
    %209 = vmatpush1.msra.mxu0 0.0
    %210 = vmatprep.subr.mxu0 0.0
    %211 = vmatpush1.msra.mxu0 0.0
    %212 = vmatprep.subr.mxu0 0.0
    %213 = vmatpush1.msra.mxu0 0.0
    %214 = vmatprep.subr.mxu0 0.0
    %215 = vmatpush1.msra.mxu0 0.0
    %216 = vmatprep.subr.mxu0 0.0
    %217 = vmatpush1.msra.mxu0 0.0
    %218 = vmatprep.subr.mxu0 0.0
    %219 = vmatpush1.msra.mxu0 0.0
    %220 = vmatprep.subr.mxu0 0.0
    %221 = vmatpush1.msra.mxu0 0.0
    %222 = vmatprep.subr.mxu0 0.0
    %223 = vmatpush1.msra.mxu0 0.0
    %224 = vmatprep.subr.mxu0 0.0
    %225 = vmatpush1.msra.mxu0 0.0
    %226 = vmatprep.subr.mxu0 0.0
    %227 = vmatpush1.msra.mxu0 0.0
    %228 = vmatprep.subr.mxu0 0.0
    %229 = vmatpush1.msra.mxu0 0.0
    %230 = vmatprep.subr.mxu0 0.0
    %231 = vmatpush1.msra.mxu0 0.0
    %232 = vmatprep.subr.mxu0 0.0
    %233 = vmatpush1.msra.mxu0 0.0
    %234 = vmatprep.mubr.f32.mxu0 0.0
    %235 = vmatmul.mubr.f32.gmra.mrb[0].mxu0 %v164
    %v236 = vpop.f32.mrb[0].mxu0
    %v237 = vadd.f32 %v150, %v236
    %v238 = vpop.f32.mrb[0].mxu0
    %239 = vmatprep.mubr.f32.mxu0 0.0
    %240 = vmatmul.mubr.f32.gmra.mrb[0].mxu0 %v166
    %v241 = vpop.f32.mrb[0].mxu0
    %v242 = vadd.f32 %v155, %v241
    %v243 = vpop.f32.mrb[0].mxu0
    %244 = vmatprep.mubr.f32.mxu0 0.0
    %245 = vmatmul.mubr.f32.gmra.mrb[0].mxu0 %v168
    %v246 = vpop.f32.mrb[0].mxu0
    %v247 = vadd.f32 %v160, %v246
    %v248 = vpop.f32.mrb[0].mxu0
    %249 = vdwg.mxu0
    %250 = vset.pattern.permute.xlu0 24
    %251 = vperm.xlu0 %250, %v57
    %v252 = vpop.permute.xlu0 %251
    %254 = vset.pattern.permute.xlu0 24
    %255 = vperm.xlu0 %254, %v58
    %v256 = vpop.permute.xlu0 %255
    %258 = vset.pattern.permute.xlu0 24
    %259 = vperm.xlu0 %258, %v59
    %v260 = vpop.permute.xlu0 %259
    %v262 = vadd.f32 %v237, %v252
    %v263 = vadd.f32 %v242, %v256
    %v264 = vadd.f32 %v247, %v260
    %v265 = vmax.f32 %v262, 0.0
    %v266 = vmax.f32 %v263, 0.0
    %v267 = vmax.f32 %v264, 0.0
    %v268 = vadd.f32 %v265, %v266
    %vm269 = vcmask 1043456
    %v270 = vsel %vm269, %v267, 0.0
    %v271 = vadd.f32 %v268, %v270
    %v272 = vrot.slane %v271, 4
    %v273 = vadd.f32 %v271, %v272
    %v274 = vrot.slane %v273, 2
    %v275 = vadd.f32 %v273, %v274
    %v276 = vrot.slane %v275, 1
    %v277 = vadd.f32 %v275, %v276
    %v278 = vmul.f32 %v265, %v265
    %v279 = vmul.f32 %v266, %v266
    %v280 = vmul.f32 %v267, %v267
    %v281 = vadd.f32 %v278, %v279
    %v282 = vsel %vm269, %v280, 0.0
    %v283 = vadd.f32 %v281, %v282
    %v284 = vrot.slane %v283, 4
    %v285 = vadd.f32 %v283, %v284
    %v286 = vrot.slane %v285, 2
    %v287 = vadd.f32 %v285, %v286
    %v288 = vrot.slane %v287, 1
    %v289 = vadd.f32 %v287, %v288
    %v290 = vmul.f32 %v277, 0.05
    %v291 = vmul.f32 %v289, 0.05
    %v292 = vmul.f32 %v290, %v290
    %v293 = vsub.f32 %v291, %v292
    %v294 = vmax.f32 %v293, 0.0
    %v295 = vsub.f32 %v265, %v290
    %v296 = vsub.f32 %v266, %v290
    %v297 = vsub.f32 %v267, %v290
    %v298 = vadd.f32 %v294, 1e-05
    %v299 = vrsqrt.pop %v298
    %v300 = vmul.f32 %v295, %v299
    %v301 = vmul.f32 %v296, %v299
    %v302 = vmul.f32 %v297, %v299
    %304 = vset.pattern.permute.xlu0 20
    %305 = vperm.xlu0 %304, %v60
    %v306 = vpop.permute.xlu0 %305
    %309 = vset.pattern.permute.xlu0 20
    %310 = vperm.xlu0 %309, %v61
    %v311 = vpop.permute.xlu0 %310
    %314 = vset.pattern.permute.xlu0 20
    %315 = vperm.xlu0 %314, %v62
    %v316 = vpop.permute.xlu0 %315
    %vm318 = vcmask 162816
    %v319 = vsel %vm318, %v60, 0
    %v321 = vsel %vm318, %v61, 0
    %v323 = vsel %vm318, %v62, 0
    %v326 = vsel %vm269, %v302, 0
    %328 = vmatprep.subr.mxu0 0.0
    %329 = vmatpush1.msra.mxu0 %v300
    %330 = vmatprep.subr.mxu0 0.0
    %331 = vmatpush1.msra.mxu0 %v301
    %332 = vmatprep.subr.mxu0 0.0
    %333 = vmatpush1.msra.mxu0 %v326
    %334 = vmatprep.subr.mxu0 0.0
    %335 = vmatpush1.msra.mxu0 0.0
    %336 = vmatprep.subr.mxu0 0.0
    %337 = vmatpush1.msra.mxu0 0.0
    %338 = vmatprep.subr.mxu0 0.0
    %339 = vmatpush1.msra.mxu0 0.0
    %340 = vmatprep.subr.mxu0 0.0
    %341 = vmatpush1.msra.mxu0 0.0
    %342 = vmatprep.subr.mxu0 0.0
    %343 = vmatpush1.msra.mxu0 0.0
    %344 = vmatprep.subr.mxu0 0.0
    %345 = vmatpush1.msra.mxu0 0.0
    %346 = vmatprep.subr.mxu0 0.0
    %347 = vmatpush1.msra.mxu0 0.0
    %348 = vmatprep.subr.mxu0 0.0
    %349 = vmatpush1.msra.mxu0 0.0
    %350 = vmatprep.subr.mxu0 0.0
    %351 = vmatpush1.msra.mxu0 0.0
    %352 = vmatprep.subr.mxu0 0.0
    %353 = vmatpush1.msra.mxu0 0.0
    %354 = vmatprep.subr.mxu0 0.0
    %355 = vmatpush1.msra.mxu0 0.0
    %356 = vmatprep.subr.mxu0 0.0
    %357 = vmatpush1.msra.mxu0 0.0
    %358 = vmatprep.subr.mxu0 0.0
    %359 = vmatpush1.msra.mxu0 0.0
    %360 = vmatprep.subr.mxu0 0.0
    %361 = vmatpush1.msra.mxu0 0.0
    %362 = vmatprep.subr.mxu0 0.0
    %363 = vmatpush1.msra.mxu0 0.0
    %364 = vmatprep.subr.mxu0 0.0
    %365 = vmatpush1.msra.mxu0 0.0
    %366 = vmatprep.subr.mxu0 0.0
    %367 = vmatpush1.msra.mxu0 0.0
    %368 = vmatprep.subr.mxu0 0.0
    %369 = vmatpush1.msra.mxu0 0.0
    %370 = vmatprep.subr.mxu0 0.0
    %371 = vmatpush1.msra.mxu0 0.0
    %372 = vmatprep.subr.mxu0 0.0
    %373 = vmatpush1.msra.mxu0 0.0
    %374 = vmatprep.subr.mxu0 0.0
    %375 = vmatpush1.msra.mxu0 0.0
    %376 = vmatprep.subr.mxu0 0.0
    %377 = vmatpush1.msra.mxu0 0.0
    %378 = vmatprep.subr.mxu0 0.0
    %379 = vmatpush1.msra.mxu0 0.0
    %380 = vmatprep.subr.mxu0 0.0
    %381 = vmatpush1.msra.mxu0 0.0
    %382 = vmatprep.subr.mxu0 0.0
    %383 = vmatpush1.msra.mxu0 0.0
    %384 = vmatprep.subr.mxu0 0.0
    %385 = vmatpush1.msra.mxu0 0.0
    %386 = vmatprep.subr.mxu0 0.0
    %387 = vmatpush1.msra.mxu0 0.0
    %388 = vmatprep.subr.mxu0 0.0
    %389 = vmatpush1.msra.mxu0 0.0
    %390 = vmatprep.subr.mxu0 0.0
    %391 = vmatpush1.msra.mxu0 0.0
    %392 = vmatprep.mubr.f32.mxu0 0.0
    %393 = vmatmul.mubr.f32.gmra.mrb[0].mxu0 %v319
    %v394 = vpop.f32.mrb[0].mxu0
    %v395 = vadd.f32 %v306, %v394
    %v396 = vpop.f32.mrb[0].mxu0
    %397 = vmatprep.mubr.f32.mxu0 0.0
    %398 = vmatmul.mubr.f32.gmra.mrb[0].mxu0 %v321
    %v399 = vpop.f32.mrb[0].mxu0
    %v400 = vadd.f32 %v311, %v399
    %v401 = vpop.f32.mrb[0].mxu0
    %402 = vmatprep.mubr.f32.mxu0 0.0
    %403 = vmatmul.mubr.f32.gmra.mrb[0].mxu0 %v323
    %v404 = vpop.f32.mrb[0].mxu0
    %v405 = vadd.f32 %v316, %v404
    %v406 = vpop.f32.mrb[0].mxu0
    %407 = vdwg.mxu0
    %v408 = vmax.f32 %v395, 0.0
    %v409 = vmax.f32 %v400, 0.0
    %v410 = vmax.f32 %v405, 0.0
    %v411 = vadd.f32 %v408, %v409
    %v412 = vsel %vm269, %v410, 0.0
    %v413 = vadd.f32 %v411, %v412
    %v414 = vrot.slane %v413, 4
    %v415 = vadd.f32 %v413, %v414
    %v416 = vrot.slane %v415, 2
    %v417 = vadd.f32 %v415, %v416
    %v418 = vrot.slane %v417, 1
    %v419 = vadd.f32 %v417, %v418
    %v420 = vmul.f32 %v408, %v408
    %v421 = vmul.f32 %v409, %v409
    %v422 = vmul.f32 %v410, %v410
    %v423 = vadd.f32 %v420, %v421
    %v424 = vsel %vm269, %v422, 0.0
    %v425 = vadd.f32 %v423, %v424
    %v426 = vrot.slane %v425, 4
    %v427 = vadd.f32 %v425, %v426
    %v428 = vrot.slane %v427, 2
    %v429 = vadd.f32 %v427, %v428
    %v430 = vrot.slane %v429, 1
    %v431 = vadd.f32 %v429, %v430
    %v432 = vmul.f32 %v419, 0.05
    %v433 = vmul.f32 %v431, 0.05
    %v434 = vmul.f32 %v432, %v432
    %v435 = vsub.f32 %v433, %v434
    %v436 = vmax.f32 %v435, 0.0
    %v437 = vsub.f32 %v408, %v432
    %v438 = vsub.f32 %v409, %v432
    %v439 = vsub.f32 %v410, %v432
    %v440 = vadd.f32 %v436, 1e-05
    %v441 = vrsqrt.pop %v440
    %v442 = vmul.f32 %v437, %v441
    %v443 = vmul.f32 %v438, %v441
    %v444 = vmul.f32 %v439, %v441
    %446 = vset.pattern.permute.xlu0 0
    %447 = vperm.xlu0 %446, %v63
    %v448 = vpop.permute.xlu0 %447
    %451 = vset.pattern.permute.xlu0 0
    %452 = vperm.xlu0 %451, %v64
    %v453 = vpop.permute.xlu0 %452
    %456 = vset.pattern.permute.xlu0 0
    %457 = vperm.xlu0 %456, %v65
    %v458 = vpop.permute.xlu0 %457
    %v460 = vmul.f32 %v442, %v448
    %v461 = vmul.f32 %v443, %v453
    %v462 = vmul.f32 %v444, %v458
    %v463 = vadd.f32 %v460, %v461
    %v464 = vsel %vm269, %v462, 0.0
    %v465 = vadd.f32 %v463, %v464
    %v466 = vrot.slane %v465, 4
    %v467 = vadd.f32 %v465, %v466
    %v468 = vrot.slane %v467, 2
    %v469 = vadd.f32 %v467, %v468
    %v470 = vrot.slane %v469, 1
    %v471 = vadd.f32 %v469, %v470
    %473 = vset.pattern.permute.xlu0 1
    %474 = vperm.xlu0 %473, %v66
    %v475 = vpop.permute.xlu0 %474
    %v477 = vadd.f32 %v471, %v475
    %478 = vst [vmem:[#allocation8] sm:$0x1] %v477
    // Predicated region
    $region26: #{tpu_custom_call.1} parent=1 // pred_check
      _
    $region27: #{tpu_custom_call.1} parent=1 // pred_check_branch
      %480 = sbr.rel (0) target = $region29
    $region28: #{tpu_custom_call.1} parent=1 // pred_region
      %s482 = ssub.s32 16, 16
      %483 = vsyncadd [#allocation4], %s482
      %s485 = sshll.u32 [#allocation8], 4
      %s486 = int_to_ptr.vmem [resolvable:$true] %s485
      %488 = dma.vmem_to_hbm [thread:$0]  %s486, 16, %s3, [#allocation4]
    $region29: #{tpu_custom_call.1} parent=1 // pred_fallthru
      _
    // Predicated region
    $region30: #{tpu_custom_call.1} parent=1 // pred_check
      _
    $region31: #{tpu_custom_call.1} parent=1 // pred_check_branch
      %490 = sbr.rel (0) target = $region33
    $region32: #{tpu_custom_call.1} parent=1 // pred_region
      %491 = dma.done [#allocation4], 16
    $region33: #{tpu_custom_call.1} parent=1 // pred_fallthru
      _
    %492 = vsyncpa [#allocation3], 1
    %493 = vsyncpa [#allocation6], 1
    %494 = vsyncpa [#allocation4], 1

</llo_original>
